<compile_context>
chip_gen: v7x
topology: tpu7x:2x2x1
jax: 0.10.0
libtpu: 0.0.40
codegen_flags: <defaults>
</compile_context>

<pallas_src>
import functools

import jax
import jax.numpy as jnp
from jax import lax
from jax.experimental import pallas as pl
from jax.experimental.pallas import tpu as pltpu

MAX_NORM = 3.0       # nn.Embedding(max_norm=3.0)
NUM_EMB = 10         # vocabulary size
NUM_EMB_PAD = 16     # table rows padded to a clean MXU K dim


def _round_up(x, m):
    return ((x + m - 1) // m) * m


def _emb_block_kernel(ids_ref, tab_ref, o_ref, *, activate: bool):
    """One tile of tokens: gather(fused_table)[ids] -> optional SiLU."""
    tn = ids_ref.shape[-1]
    ids = ids_ref[0]                                               # [1, tn] int32

    # One-hot gather against the lane-dense ids: sublane iota vs. lane ids.
    rows = lax.broadcasted_iota(jnp.int32, (NUM_EMB_PAD, tn), 0)   # [16, tn]
    one_hot = (rows == ids).astype(jnp.float32)                    # [16, tn]

    # y[t, :] = fused_table[ids[t], :]   — one small MXU matmul, K = 16.
    y = lax.dot_general(one_hot, tab_ref[...],
                        dimension_numbers=(((0,), (0,)), ((), ())),
                        preferred_element_type=jnp.float32)        # [tn, E]

    if activate:
        # SiLU: exp and the approximate reciprocal both stay on the EUP slot.
        y = y * pl.reciprocal(1.0 + jnp.exp(-y), approx=True)

    o_ref[...] = y.astype(o_ref.dtype)


def embedding_block(atomic_num, emb_table, w, b, *, activate=True,
                    block_n=2048, out_dtype=jnp.float32):
    """Forward pass of EmbeddingBlock.

    atomic_num: int32 [N]       token ids in [0, 10)
    emb_table:  f32  [10, E]    (row 0 is the padding row, zeros)
    w:          f32  [E, E]     linear weight, pre-transposed to [in, out]
    b:          f32  [1, E]     linear bias
    returns:    out_dtype [N, E]
    """
    N = atomic_num.shape[0]
    E = emb_table.shape[1]

    # ---- Fold max_norm renorm + Linear into one constant table (XLA, once). ----
    # PyTorch max_norm: scale = max_norm / (norm + 1e-7) applied only when
    # norm > max_norm.  Row-wise renorm commutes with the gather.
    norm = jnp.linalg.norm(emb_table, axis=-1, keepdims=True)
    table = emb_table * jnp.where(norm > MAX_NORM, MAX_NORM / (norm + 1e-7), 1.0)
    fused = table @ w + b                                           # [10, E]
    fused = jnp.pad(fused, ((0, NUM_EMB_PAD - NUM_EMB), (0, 0)))    # [16, E]
    fused = fused.astype(jnp.float32)

    # ---- Token tiling. ----
    n8 = _round_up(max(N, 1), 8)
    block_n = _round_up(max(block_n, 128), 128)
    tn = min(block_n, n8)
    if n8 >= 512:
        # Keep at least two "parallel" tiles so both v7x TensorCores get work.
        tn = min(tn, _round_up((n8 + 1) // 2, 256))
    n_tiles = (n8 + tn - 1) // tn
    Np = n_tiles * tn

    # Pad only the cheap int32 id vector (id 0 -> zero embedding -> SiLU(b)=0,
    # sliced off below).  Lane-dense layout: [n_tiles, 1, tn].
    ids = atomic_num.astype(jnp.int32)
    if Np != N:
        ids = jnp.pad(ids, (0, Np - N))
    ids3 = ids.reshape(n_tiles, 1, tn)

    out = pl.pallas_call(
        functools.partial(_emb_block_kernel, activate=activate),
        out_shape=jax.ShapeDtypeStruct((Np, E), out_dtype),
        grid_spec=pltpu.PrefetchScalarGridSpec(
            num_scalar_prefetch=0,
            grid=(n_tiles,),
            in_specs=[
                pl.BlockSpec((1, 1, tn), lambda i: (i, 0, 0)),       # lane-dense ids
                pl.BlockSpec((NUM_EMB_PAD, E), lambda i: (0, 0)),    # fused table (resident)
            ],
            out_specs=pl.BlockSpec((tn, E), lambda i: (i, 0)),
        ),
        compiler_params=pltpu.CompilerParams(
            dimension_semantics=("parallel",)),
    )(ids3, fused)

    return out if Np == N else out[:N]


def init_params(key, embedding_size=128):
    """Deterministic, in-script parameter init (mirrors shapes from __init__)."""
    k_emb, k_w = jax.random.split(key)

    # nn.Embedding(10, E, padding_idx=0): N(0,1) init, padding row zeroed.
    emb_table = jax.random.normal(k_emb, (NUM_EMB, embedding_size), jnp.float32)
    emb_table = emb_table.at[0].set(0.0)

    # Glorot_Ortho_(lin.weight): orthogonal matrix scaled by glorot std.
    gain = jnp.sqrt(2.0 / (embedding_size + embedding_size))
    w_ortho = jax.nn.initializers.orthogonal()(k_w,
                                               (embedding_size, embedding_size),
                                               jnp.float32)
    w = (w_ortho * gain).T  # store as [E_in, E_out] for y = x @ W

    b = jnp.zeros((1, embedding_size), jnp.float32)  # zeros_(lin.bias)
    return emb_table, w, b


def _reference(atomic_num, emb_table, w, b, activate=True):
    x = jnp.take(emb_table, atomic_num, axis=0)
    norm = jnp.linalg.norm(x, axis=-1, keepdims=True)
    x = x * jnp.where(norm > MAX_NORM, MAX_NORM / (norm + 1e-7), 1.0)
    y = x @ w + b
    return y * jax.nn.sigmoid(y) if activate else y


if __name__ == "__main__":
    key = jax.random.PRNGKey(0)
    embedding_size = 128
    emb_table, w, b = init_params(key, embedding_size)

    def check(N, seed, activate=True, **kw):
        k_idx = jax.random.fold_in(key, seed)
        ids = jax.random.randint(k_idx, (N,), 0, NUM_EMB, dtype=jnp.int32)
        out = embedding_block(ids, emb_table, w, b, activate=activate, **kw)
        out = jax.block_until_ready(out)
        ref = _reference(ids, emb_table, w, b, activate=activate)
        assert out.shape == (N, embedding_size)
        err = float(jnp.max(jnp.abs(out - ref)))
        assert jnp.allclose(out, ref, atol=1e-4, rtol=1e-4), err

    check(8, 1)                           # tiny single-tile case
    check(8, 1, activate=False)           # linear-only path
    check(300, 2, block_n=128)            # multi-tile + ragged tail
    check(1024, 3)                        # >=512 path: two "parallel" tiles (v7x split)

    print("KERNEL_OK")
</pallas_src>

<mosaic_0001>
module attributes {stable_mosaic.version = 11 : i64} {
  func.func @_emb_block_kernel(%arg0: i32, %arg1: memref<1x1x8xi32, #tpu.memory_space<vmem>>, %arg2: memref<16x128xf32, #tpu.memory_space<vmem>>, %arg3: memref<8x128xf32, #tpu.memory_space<vmem>>) attributes {dimension_semantics = [#tpu.dimension_semantics<parallel>], iteration_bounds = array<i64: 1>, scalar_prefetch = 0 : i64, scratch_operands = 0 : i64, tpu.core_type = #tpu.core_type<tc>, window_params = [{transform_indices = @transform_0, window_bounds = array<i64: 1, 1, 8>}, {pipeline_mode = #tpu.pipeline_mode<synchronous>, transform_indices = @transform_1, window_bounds = array<i64: 16, 128>}, {transform_indices = @transform_2, window_bounds = array<i64: 8, 128>}]} {
    %c0 = arith.constant 0 : index
    %c0_0 = arith.constant 0 : index
    %c0_1 = arith.constant 0 : index
    %0 = vector.load %arg1[%c0, %c0_0, %c0_1] : memref<1x1x8xi32, #tpu.memory_space<vmem>>, vector<1x1x8xi32>
    %1 = vector.shape_cast %0 : vector<1x1x8xi32> to vector<1x8xi32>
    %2 = tpu.iota {dimensions = array<i32: 0>} : vector<16x8xi32>
    %3 = vector.broadcast %1 : vector<1x8xi32> to vector<16x8xi32>
    %4 = arith.cmpi eq, %2, %3 : vector<16x8xi32>
    %5 = arith.extui %4 : vector<16x8xi1> to vector<16x8xi32>
    %6 = arith.sitofp %5 : vector<16x8xi32> to vector<16x8xf32>
    %c0_2 = arith.constant 0 : index
    %c0_3 = arith.constant 0 : index
    %7 = vector.load %arg2[%c0_2, %c0_3] : memref<16x128xf32, #tpu.memory_space<vmem>>, vector<16x128xf32>
    %cst = arith.constant dense<0.000000e+00> : vector<8x128xf32>
    %8 = tpu.matmul %6, %7, %cst {dimension_numbers = #tpu.dot_dimension_numbers<[0], [0], [1], [1], [0, 1, 1, 1], [], []>} : vector<16x8xf32>, vector<16x128xf32>, vector<8x128xf32> -> vector<8x128xf32>
    %cst_4 = arith.constant 0.000000e+00 : f32
    %9 = vector.broadcast %cst_4 : f32 to vector<8x128xf32>
    %10 = arith.subf %9, %8 : vector<8x128xf32>
    %11 = math.exp %10 : vector<8x128xf32>
    %cst_5 = arith.constant 1.000000e+00 : f32
    %12 = vector.broadcast %cst_5 : f32 to vector<8x128xf32>
    %13 = arith.addf %12, %11 : vector<8x128xf32>
    %14 = tpu.reciprocal %13 {approx = true} : vector<8x128xf32> -> vector<8x128xf32>
    %15 = arith.mulf %8, %14 : vector<8x128xf32>
    %c0_6 = arith.constant 0 : index
    %c0_7 = arith.constant 0 : index
    %16 = vector.load %arg3[%c0_6, %c0_7] : memref<8x128xf32, #tpu.memory_space<vmem>>, vector<8x128xf32>
    tpu.vector_store %arg3[%c0_6, %c0_7], %15 {strides = array<i32>} : memref<8x128xf32, #tpu.memory_space<vmem>>, vector<8x128xf32>,
    return
  }
  func.func @transform_0(%arg0: i32) -> (i32, i32, i32) {
    %c0_i32 = arith.constant 0 : i32
    %c0_i32_0 = arith.constant 0 : i32
    %c0_i32_1 = arith.constant 0 : i32
    return %arg0, %c0_i32, %c0_i32_0 : i32, i32, i32
  }
  func.func @transform_1(%arg0: i32) -> (i32, i32) {
    %c0_i32 = arith.constant 0 : i32
    %c0_i32_0 = arith.constant 0 : i32
    %c0_i32_1 = arith.constant 0 : i32
    return %c0_i32, %c0_i32_0 : i32, i32
  }
  func.func @transform_2(%arg0: i32) -> (i32, i32) {
    %c0_i32 = arith.constant 0 : i32
    %c0_i32_0 = arith.constant 0 : i32
    return %arg0, %c0_i32 : i32, i32
  }
}

</mosaic_0001>

<llo_original>
// kernel: tpu_custom_call.1
$region0: #{tpu_custom_call.1}
  #allocation0 [shape = 'u32[]', space=smem, size = 0x4, offset = 0x4, fixed_abs, tag = 'smem constant byte address 0x4 - core index']
  #allocation1 [shape = 'u32[144,128]{1,0:T(1,128)}', space=vmem, size = 0x12000, scoped, tag = 'internal scratch']
  %s0 = inlined_call_operand.hbm [shape: s32[1,1,8], index: 0, kind: input, shape index: {}]
  %s1 = inlined_call_operand.hbm [shape: f32[16,128], index: 1, kind: input, shape index: {}]
  %s2 = inlined_call_operand.hbm [shape: f32[8,128], index: 2, kind: output, shape index: {}]
  %s3 = sld [smem:[#allocation0]]
  $region26: #{tpu_custom_call.1} parent=0
    _
  %s5 = ssub.s32 1, %s3
  %s6 = scalar_select 0, %s5, %s3
  $region1: #{tpu_custom_call.1} parent=0
    #allocation2 [shape = 'u8[512]{0}', space=vmem, size = 0x400, scoped, tag = 'input window, operand 0, single buffered']
    #allocation3 [shape = 's32[1]{0}', space=sflag, size = 0x4, scoped, tag = 'scoped memory for tpu_custom_call.1']
    #allocation4 [shape = 's32[1]{0}', space=sflag, size = 0x4, scoped, tag = 'scoped memory for tpu_custom_call.1']
    #allocation5 [shape = 'u8[8192]{0}', space=vmem, size = 0x2000, scoped, tag = 'input window, operand 1, single buffered']
    #allocation6 [shape = 's32[1]{0}', space=sflag, size = 0x4, scoped, tag = 'scoped memory for tpu_custom_call.1']
    #allocation7 [shape = 'u8[4096]{0}', space=vmem, size = 0x1000, scoped, tag = 'output window, operand 0, single buffered']
    %7 = vsyncpa [#allocation3], 0
    %8 = vsyncpa [#allocation6], 0
    %9 = vsyncpa [#allocation4], 0
    // Predicated region
    $region2: #{tpu_custom_call.1} parent=1 // pred_check
      _
    $region3: #{tpu_custom_call.1} parent=1 // pred_check_branch
      %11 = sbr.rel (0) target = $region5
    $region4: #{tpu_custom_call.1} parent=1 // pred_region
      %s13 = ssub.s32 16, 16
      %14 = vsyncadd [#allocation3], %s13
      %s16 = sshll.u32 [#allocation2], 4
      %s17 = int_to_ptr.vmem [resolvable:$true] %s16
      %19 = dma.hbm_to_vmem [thread:$0]  %s0, 16, %s17, [#allocation3]
    $region5: #{tpu_custom_call.1} parent=1 // pred_fallthru
      _
    // Predicated region
    $region6: #{tpu_custom_call.1} parent=1 // pred_check
      _
    $region7: #{tpu_custom_call.1} parent=1 // pred_check_branch
      %21 = sbr.rel (0) target = $region9
    $region8: #{tpu_custom_call.1} parent=1 // pred_region
      %s23 = ssub.s32 256, 256
      %24 = vsyncadd [#allocation6], %s23
      %s25 = sshll.u32 [#allocation5], 4
      %s26 = int_to_ptr.vmem [resolvable:$true] %s25
      %31 = dma.hbm_to_vmem [thread:$0]  %s1, 256, %s26, [#allocation6], 128, 128, 8
    $region9: #{tpu_custom_call.1} parent=1 // pred_fallthru
      _
    // Predicated region
    $region10: #{tpu_custom_call.1} parent=1 // pred_check
      _
    $region11: #{tpu_custom_call.1} parent=1 // pred_check_branch
      %33 = sbr.rel (0) target = $region13
    $region12: #{tpu_custom_call.1} parent=1 // pred_region
      %34 = dma.done [#allocation3], 16
    $region13: #{tpu_custom_call.1} parent=1 // pred_fallthru
      _
    // Predicated region
    $region14: #{tpu_custom_call.1} parent=1 // pred_check
      _
    $region15: #{tpu_custom_call.1} parent=1 // pred_check_branch
      %36 = sbr.rel (0) target = $region17
    $region16: #{tpu_custom_call.1} parent=1 // pred_region
      %37 = dma.done [#allocation6], 256
    $region17: #{tpu_custom_call.1} parent=1 // pred_fallthru
      _
    %v38 = vld [vmem:[#allocation2] sm:$0x1]
    %v39 = vlaneseq
    %v40 = vshrl.u32 %v39, 7
    %v41 = vadd.s32 %v40, 8
    %v42 = vlaneseq
    %v43 = vshrl.u32 %v42, 7
    %v44 = vsub.s32 0, %v43
    %v45 = vrot.slane %v38, %v44
    %vm46 = vcmp.eq.s32.totalorder %v40, %v45
    %vm47 = vcmp.eq.s32.totalorder %v41, %v45
    %v48 = vsel %vm46, 1, 0
    %v49 = vsel %vm47, 1, 0
    %v50 = vcvt.s32.f32 %v48
    %v51 = vcvt.s32.f32 %v49
    %v52 = vld [vmem:[#allocation5] sm:$0xff]
    %v53 = vld [vmem:[#allocation5 + $0x8] sm:$0xff]
    %54 = vxpose.xlu0.b32.start [1/16] %v50, 128
    %55 = vxpose.xlu0.b32.cont [2/16] %v51, 128
    %56 = vxpose.xlu0.b32.cont [3/16] 0.0, 128
    %57 = vxpose.xlu0.b32.cont [4/16] 0.0, 128
    %58 = vxpose.xlu0.b32.cont [5/16] 0.0, 128
    %59 = vxpose.xlu0.b32.cont [6/16] 0.0, 128
    %60 = vxpose.xlu0.b32.cont [7/16] 0.0, 128
    %61 = vxpose.xlu0.b32.cont [8/16] 0.0, 128
    %62 = vxpose.xlu0.b32.cont [9/16] 0.0, 128
    %63 = vxpose.xlu0.b32.cont [10/16] 0.0, 128
    %64 = vxpose.xlu0.b32.cont [11/16] 0.0, 128
    %65 = vxpose.xlu0.b32.cont [12/16] 0.0, 128
    %66 = vxpose.xlu0.b32.cont [13/16] 0.0, 128
    %67 = vxpose.xlu0.b32.cont [14/16] 0.0, 128
    %68 = vxpose.xlu0.b32.cont [15/16] 0.0, 128
    %69 = vxpose.xlu0.b32.end [16/16] 0.0, 128
    %v70 = vpop.trf.xlu0
    %v71 = vpop.trf.xlu0
    %v72 = vpop.trf.xlu0
    %v73 = vpop.trf.xlu0
    %v74 = vpop.trf.xlu0
    %v75 = vpop.trf.xlu0
    %v76 = vpop.trf.xlu0
    %v77 = vpop.trf.xlu0
    %v78 = vpop.trf.xlu0
    %v79 = vpop.trf.xlu0
    %v80 = vpop.trf.xlu0
    %v81 = vpop.trf.xlu0
    %v82 = vpop.trf.xlu0
    %v83 = vpop.trf.xlu0
    %v84 = vpop.trf.xlu0
    %v85 = vpop.trf.xlu0
    %vm86 = vcmask 130048
    %v88 = vsel %vm86, %v70, 0
    %90 = vmatprep.subr.mxu0 0.0
    %91 = vmatpush1.msra.mxu0 %v52
    %92 = vmatprep.subr.mxu0 0.0
    %93 = vmatpush1.msra.mxu0 %v53
    %94 = vmatprep.subr.mxu0 0.0
    %95 = vmatpush1.msra.mxu0 0.0
    %96 = vmatprep.subr.mxu0 0.0
    %97 = vmatpush1.msra.mxu0 0.0
    %98 = vmatprep.subr.mxu0 0.0
    %99 = vmatpush1.msra.mxu0 0.0
    %100 = vmatprep.subr.mxu0 0.0
    %101 = vmatpush1.msra.mxu0 0.0
    %102 = vmatprep.subr.mxu0 0.0
    %103 = vmatpush1.msra.mxu0 0.0
    %104 = vmatprep.subr.mxu0 0.0
    %105 = vmatpush1.msra.mxu0 0.0
    %106 = vmatprep.subr.mxu0 0.0
    %107 = vmatpush1.msra.mxu0 0.0
    %108 = vmatprep.subr.mxu0 0.0
    %109 = vmatpush1.msra.mxu0 0.0
    %110 = vmatprep.subr.mxu0 0.0
    %111 = vmatpush1.msra.mxu0 0.0
    %112 = vmatprep.subr.mxu0 0.0
    %113 = vmatpush1.msra.mxu0 0.0
    %114 = vmatprep.subr.mxu0 0.0
    %115 = vmatpush1.msra.mxu0 0.0
    %116 = vmatprep.subr.mxu0 0.0
    %117 = vmatpush1.msra.mxu0 0.0
    %118 = vmatprep.subr.mxu0 0.0
    %119 = vmatpush1.msra.mxu0 0.0
    %120 = vmatprep.subr.mxu0 0.0
    %121 = vmatpush1.msra.mxu0 0.0
    %122 = vmatprep.subr.mxu0 0.0
    %123 = vmatpush1.msra.mxu0 0.0
    %124 = vmatprep.subr.mxu0 0.0
    %125 = vmatpush1.msra.mxu0 0.0
    %126 = vmatprep.subr.mxu0 0.0
    %127 = vmatpush1.msra.mxu0 0.0
    %128 = vmatprep.subr.mxu0 0.0
    %129 = vmatpush1.msra.mxu0 0.0
    %130 = vmatprep.subr.mxu0 0.0
    %131 = vmatpush1.msra.mxu0 0.0
    %132 = vmatprep.subr.mxu0 0.0
    %133 = vmatpush1.msra.mxu0 0.0
    %134 = vmatprep.subr.mxu0 0.0
    %135 = vmatpush1.msra.mxu0 0.0
    %136 = vmatprep.subr.mxu0 0.0
    %137 = vmatpush1.msra.mxu0 0.0
    %138 = vmatprep.subr.mxu0 0.0
    %139 = vmatpush1.msra.mxu0 0.0
    %140 = vmatprep.subr.mxu0 0.0
    %141 = vmatpush1.msra.mxu0 0.0
    %142 = vmatprep.subr.mxu0 0.0
    %143 = vmatpush1.msra.mxu0 0.0
    %144 = vmatprep.subr.mxu0 0.0
    %145 = vmatpush1.msra.mxu0 0.0
    %146 = vmatprep.subr.mxu0 0.0
    %147 = vmatpush1.msra.mxu0 0.0
    %148 = vmatprep.subr.mxu0 0.0
    %149 = vmatpush1.msra.mxu0 0.0
    %150 = vmatprep.subr.mxu0 0.0
    %151 = vmatpush1.msra.mxu0 0.0
    %152 = vmatprep.subr.mxu0 0.0
    %153 = vmatpush1.msra.mxu0 0.0
    %154 = vmatprep.mubr.f32.mxu0 0.0
    %155 = vmatmul.mubr.f32.gmra.mrb[0].mxu0 %v88
    %v156 = vpop.f32.mrb[0].mxu0
    %v157 = vadd.f32 0.0, %v156
    %v158 = vpop.f32.mrb[0].mxu0
    %159 = vdwg.mxu0
    %v160 = vsub.f32 0.0, %v157
    %v161 = vmul.f32 %v160, 1.442695
    %v162 = vpow.pop %v161
    %v163 = vadd.f32 %v162, 1.0
    %v164 = vrcp.pop %v163
    %v165 = vmul.f32 %v157, %v164
    %166 = vst [vmem:[#allocation7] sm:$0xff] %v165
    // Predicated region
    $region18: #{tpu_custom_call.1} parent=1 // pred_check
      _
    $region19: #{tpu_custom_call.1} parent=1 // pred_check_branch
      %168 = sbr.rel (0) target = $region21
    $region20: #{tpu_custom_call.1} parent=1 // pred_region
      %s170 = ssub.s32 128, 128
      %171 = vsyncadd [#allocation4], %s170
      %s173 = sshll.u32 [#allocation7], 4
      %s174 = int_to_ptr.vmem [resolvable:$true] %s173
      %176 = dma.vmem_to_hbm [thread:$0]  %s174, 128, %s2, [#allocation4]
    $region21: #{tpu_custom_call.1} parent=1 // pred_fallthru
      _
    // Predicated region
    $region22: #{tpu_custom_call.1} parent=1 // pred_check
      _
    $region23: #{tpu_custom_call.1} parent=1 // pred_check_branch
      %178 = sbr.rel (0) target = $region25
    $region24: #{tpu_custom_call.1} parent=1 // pred_region
      %179 = dma.done [#allocation4], 128
    $region25: #{tpu_custom_call.1} parent=1 // pred_fallthru
      _
    %180 = vsyncpa [#allocation3], 1
    %181 = vsyncpa [#allocation6], 1
    %182 = vsyncpa [#allocation4], 1

</llo_original>
